<compile_context>
chip_gen: v5e
topology: v5e:2x2
jax: 0.10.0
libtpu: 0.0.40
codegen_flags: <defaults>
</compile_context>

<pallas_src>
import math
import functools

import jax
import jax.numpy as jnp
from jax import lax
from jax.experimental import pallas as pl
from jax.experimental.pallas import tpu as pltpu


# --------------------------------------------------------------------------
# Stage 1: fused projections.  kv = h @ [Wk|Wv] + [bk|bv]  (lane-dense 128),
#          q = h @ Wq + bq.  Weights are pre-folded (relation_att/msg,
#          relation_pri/sqrt(dk)) and bf16; accumulation in f32.
# --------------------------------------------------------------------------
def _proj_kernel(h_ref, wkv_ref, bkv_ref, wq_ref, bq_ref, kv_ref, q_ref):
    h = h_ref[...]                                              # (T, in) bf16
    kv = jnp.dot(h, wkv_ref[...],
                 preferred_element_type=jnp.float32) + bkv_ref[...]
    q = jnp.dot(h, wq_ref[...],
                preferred_element_type=jnp.float32) + bq_ref[...]
    kv_ref[...] = kv.astype(jnp.bfloat16)                       # unmasked 128-lane store
    q_ref[...] = q.astype(jnp.bfloat16)


# --------------------------------------------------------------------------
# Stage 2: flash-style masked per-head attention + aggregation + a_linear +
#          skip residual.  Grid = (dst tiles, src tiles); per-head online
#          softmax state lives in VMEM scratch across the src axis.
# --------------------------------------------------------------------------
def _attn_kernel(q_ref, h_ref, adj_ref, kv_ref, wa_ref, ba_ref, res_ref,
                 out_ref, m_sc, l_sc, acc_sc, *, n_heads, d_k):
    D = n_heads * d_k
    j = pl.program_id(1)

    @pl.when(j == 0)
    def _init():
        m_sc[...] = jnp.full(m_sc.shape, -1e30, jnp.float32)
        l_sc[...] = jnp.zeros(l_sc.shape, jnp.float32)
        acc_sc[...] = jnp.zeros(acc_sc.shape, jnp.float32)

    q = q_ref[...]                          # (Td, D)   bf16, already * pri/sqrt(dk)
    kv = kv_ref[...]                        # (Ts, 2D)  bf16, [k|v] already folded
    mask = adj_ref[...] > 0                 # (Td, Ts)  direct int8 compare
    neg = jnp.float32(-1e30)

    for i in range(n_heads):                # static, small head loop
        lo = i * d_k
        q_i = q[:, lo:lo + d_k]
        k_i = kv[:, lo:lo + d_k]
        v_i = kv[:, D + lo:D + lo + d_k]

        # scores[dst, src]: contract the last (lane) axis of both operands —
        # bf16 MXU inputs, f32 accumulation, no explicit transpose.
        s = lax.dot_general(q_i, k_i,
                            dimension_numbers=(((1,), (1,)), ((), ())),
                            preferred_element_type=jnp.float32)   # (Td, Ts) f32

        masked = jnp.where(mask, s, neg)
        m_old = m_sc[:, i:i + 1]
        m_new = jnp.maximum(m_old, jnp.max(masked, axis=-1, keepdims=True))
        corr = jnp.exp(m_old - m_new)                             # (Td, 1)
        # Explicit zeroing of non-edges: a dst row may have no edge inside
        # this src tile (m_new stays -1e30 there, exp(0) would be 1).
        p = jnp.where(mask, jnp.exp(masked - m_new), 0.0)          # (Td, Ts) f32

        l_sc[:, i:i + 1] = corr * l_sc[:, i:i + 1] + jnp.sum(p, axis=-1,
                                                             keepdims=True)
        m_sc[:, i:i + 1] = m_new
        acc_sc[:, lo:lo + d_k] = (
            corr * acc_sc[:, lo:lo + d_k]
            + jnp.dot(p.astype(jnp.bfloat16), v_i,
                      preferred_element_type=jnp.float32))

    @pl.when(j == pl.num_programs(1) - 1)
    def _finalize():
        # Normalize each head in place (aggregate-then-normalize: one EUP
        # reciprocal on a (Td, 1) vector per head instead of dividing the
        # dense (Td, Ts) tile) — no jnp.concatenate of head slices.
        for i in range(n_heads):
            lo = i * d_k
            acc_sc[:, lo:lo + d_k] = acc_sc[:, lo:lo + d_k] * pl.reciprocal(
                l_sc[:, i:i + 1], approx=True)
        t = acc_sc[...].astype(jnp.bfloat16)                       # (Td, D)
        # wa/ba are pre-scaled by alpha = sigmoid(skip); res holds 1 - alpha.
        trans = jnp.dot(t, wa_ref[...],
                        preferred_element_type=jnp.float32) + ba_ref[...]
        out_ref[...] = trans + h_ref[...] * res_ref[...]


# --------------------------------------------------------------------------
# Host-side parameter folding (one time).
# --------------------------------------------------------------------------
def fold_params(params, *, n_heads, d_k):
    in_dim, out_dim = params["wk"].shape
    sqrt_dk = math.sqrt(d_k)
    ratt, rmsg = params["ratt"], params["rmsg"]

    # relation_att folded into k, relation_msg folded into v.
    wk = jnp.einsum("ihd,hde->ihe",
                    params["wk"].reshape(in_dim, n_heads, d_k),
                    ratt).reshape(in_dim, out_dim)
    bk = jnp.einsum("hd,hde->he",
                    params["bk"].reshape(n_heads, d_k),
                    ratt).reshape(1, out_dim)
    wv = jnp.einsum("ihd,hde->ihe",
                    params["wv"].reshape(in_dim, n_heads, d_k),
                    rmsg).reshape(in_dim, out_dim)
    bv = jnp.einsum("hd,hde->he",
                    params["bv"].reshape(n_heads, d_k),
                    rmsg).reshape(1, out_dim)

    # relation_pri / sqrt(d_k) folded into q.
    scale = params["pri"] / sqrt_dk
    wq = (params["wq"].reshape(in_dim, n_heads, d_k)
          * scale[None, :, None]).reshape(in_dim, out_dim)
    bq = (params["bq"].reshape(1, n_heads, d_k)
          * scale[None, :, None]).reshape(1, out_dim)

    # alpha = sigmoid(skip) folded into a_linear; (1 - alpha) as a bcast row.
    alpha = jax.nn.sigmoid(params["skip"][0])
    wa = params["wa"] * alpha
    ba = params["ba"] * alpha
    res = jnp.full((1, out_dim), 1.0 - alpha, jnp.float32)

    return dict(
        wkv=jnp.concatenate([wk, wv], axis=1).astype(jnp.bfloat16),  # (in, 2*out)
        bkv=jnp.concatenate([bk, bv], axis=1).astype(jnp.float32),   # (1, 2*out)
        wq=wq.astype(jnp.bfloat16),
        bq=bq.astype(jnp.float32),
        wa=wa.astype(jnp.bfloat16),
        ba=ba.astype(jnp.float32),
        res=res,
    )


# --------------------------------------------------------------------------
# Wrapper: projection prologue + dst x src flash-tiled attention.
# --------------------------------------------------------------------------
def hgt_forward(h, adj_i8, params, *, n_heads, d_k, tile_dst=256, tile_src=256):
    N, in_dim = h.shape
    out_dim = params["wa"].shape[1]
    assert in_dim == out_dim, "skip residual requires in_dim == out_dim"
    assert out_dim == n_heads * d_k
    fp = fold_params(params, n_heads=n_heads, d_k=d_k)

    tile_dst = min(tile_dst, N)
    tile_src = min(tile_src, N)
    assert N % tile_dst == 0 and N % tile_src == 0, \
        "demo keeps N a multiple of both tiles"
    nd, ns = N // tile_dst, N // tile_src

    h_bf = h.astype(jnp.bfloat16)

    # ---- stage 1: projections, tiled over nodes ---------------------------
    kv_all, q_all = pl.pallas_call(
        _proj_kernel,
        out_shape=(jax.ShapeDtypeStruct((N, 2 * out_dim), jnp.bfloat16),
                   jax.ShapeDtypeStruct((N, out_dim), jnp.bfloat16)),
        grid=(nd,),
        in_specs=[
            pl.BlockSpec((tile_dst, in_dim), lambda i: (i, 0)),       # h (bf16)
            pl.BlockSpec((in_dim, 2 * out_dim), lambda i: (0, 0)),    # [Wk|Wv]
            pl.BlockSpec((1, 2 * out_dim), lambda i: (0, 0)),         # [bk|bv]
            pl.BlockSpec((in_dim, out_dim), lambda i: (0, 0)),        # Wq
            pl.BlockSpec((1, out_dim), lambda i: (0, 0)),             # bq
        ],
        out_specs=(pl.BlockSpec((tile_dst, 2 * out_dim), lambda i: (i, 0)),
                   pl.BlockSpec((tile_dst, out_dim), lambda i: (i, 0))),
        compiler_params=pltpu.CompilerParams(
            dimension_semantics=("parallel",)),
    )(h_bf, fp["wkv"], fp["bkv"], fp["wq"], fp["bq"])

    # ---- stage 2: flash-tiled attention ------------------------------------
    kernel = functools.partial(_attn_kernel, n_heads=n_heads, d_k=d_k)
    out = pl.pallas_call(
        kernel,
        out_shape=jax.ShapeDtypeStruct((N, out_dim), jnp.float32),
        grid=(nd, ns),
        in_specs=[
            pl.BlockSpec((tile_dst, out_dim), lambda i, j: (i, 0)),       # q
            pl.BlockSpec((tile_dst, in_dim), lambda i, j: (i, 0)),        # h (residual)
            pl.BlockSpec((tile_dst, tile_src), lambda i, j: (i, j)),      # adj int8
            pl.BlockSpec((tile_src, 2 * out_dim), lambda i, j: (j, 0)),   # [k|v] slab
            pl.BlockSpec((out_dim, out_dim), lambda i, j: (0, 0)),        # wa * alpha
            pl.BlockSpec((1, out_dim), lambda i, j: (0, 0)),              # ba * alpha
            pl.BlockSpec((1, out_dim), lambda i, j: (0, 0)),              # 1 - alpha
        ],
        out_specs=pl.BlockSpec((tile_dst, out_dim), lambda i, j: (i, 0)),
        scratch_shapes=[
            pltpu.VMEM((tile_dst, n_heads), jnp.float32),    # running max m
            pltpu.VMEM((tile_dst, n_heads), jnp.float32),    # running sum l
            pltpu.VMEM((tile_dst, out_dim), jnp.float32),    # head accumulator
        ],
        compiler_params=pltpu.CompilerParams(
            dimension_semantics=("parallel", "arbitrary"),
            # sized against v7x's 64 MiB physical VMEM; streaming blocks here
            # use far less, this just removes the default scoped-limit cap.
            vmem_limit_bytes=48 * 1024 * 1024),
    )(q_all, h, adj_i8, kv_all, fp["wa"], fp["ba"], fp["res"])
    return out


# --------------------------------------------------------------------------
# Pure-JAX f32 reference (mirrors the torch module on the dense adjacency).
# --------------------------------------------------------------------------
def reference_forward(h, adj_i8, params, *, n_heads, d_k):
    sqrt_dk = math.sqrt(d_k)
    N = h.shape[0]
    k = (h @ params["wk"] + params["bk"]).reshape(N, n_heads, d_k)
    q = (h @ params["wq"] + params["bq"]).reshape(N, n_heads, d_k)
    v = (h @ params["wv"] + params["bv"]).reshape(N, n_heads, d_k)
    k = jnp.einsum("bij,ijk->bik", k, params["ratt"])
    v = jnp.einsum("bij,ijk->bik", v, params["rmsg"])
    scores = jnp.einsum("dhc,shc->dsh", q, k) * params["pri"] / sqrt_dk
    mask = (adj_i8 > 0)[:, :, None]
    masked = jnp.where(mask, scores, -1e30)
    m = jnp.max(masked, axis=1, keepdims=True)
    e = jnp.where(mask, jnp.exp(masked - m), 0.0)
    attn = e / jnp.sum(e, axis=1, keepdims=True)
    t = jnp.einsum("dsh,shc->dhc", attn, v).reshape(N, n_heads * d_k)
    trans = t @ params["wa"] + params["ba"]
    alpha = jax.nn.sigmoid(params["skip"][0])
    return trans * alpha + h * (1.0 - alpha)


if __name__ == "__main__":
    # in_dim == out_dim (skip residual), out_dim divisible by n_heads,
    # N a multiple of both tiles so the grid is (2, 2) and the online-softmax
    # accumulation across src tiles is actually exercised.
    N, in_dim, out_dim, n_heads = 512, 64, 64, 4
    d_k = out_dim // n_heads

    key = jax.random.PRNGKey(0)
    ks = jax.random.split(key, 10)

    def xavier(k, shape):
        fan_in, fan_out = shape[-2], shape[-1]
        bound = math.sqrt(6.0 / (fan_in + fan_out))
        return jax.random.uniform(k, shape, jnp.float32, -bound, bound)

    h = jax.random.normal(ks[0], (N, in_dim), jnp.float32)
    adj = (jax.random.uniform(ks[1], (N, N)) < 0.1).astype(jnp.float32)
    # Self-loops: every dst has >= 1 in-edge (edge_softmax is undefined for
    # isolated dst nodes; both kernel and reference would divide by zero).
    adj = jnp.maximum(adj, jnp.eye(N, dtype=jnp.float32))
    adj_i8 = adj.astype(jnp.int8)

    params = {
        "wk": xavier(ks[2], (in_dim, out_dim)),
        "bk": jnp.zeros((1, out_dim), jnp.float32),
        "wq": xavier(ks[3], (in_dim, out_dim)),
        "bq": jnp.zeros((1, out_dim), jnp.float32),
        "wv": xavier(ks[4], (in_dim, out_dim)),
        "bv": jnp.zeros((1, out_dim), jnp.float32),
        "wa": xavier(ks[5], (out_dim, out_dim)),
        "ba": jnp.zeros((1, out_dim), jnp.float32),
        "ratt": xavier(ks[6], (n_heads, d_k, d_k)),   # relation_att
        "rmsg": xavier(ks[7], (n_heads, d_k, d_k)),   # relation_msg
        "pri": jnp.ones((n_heads,), jnp.float32),     # relation_pri
        "skip": jnp.ones((1,), jnp.float32),          # skip (num_types == 1)
    }

    out = hgt_forward(h, adj_i8, params, n_heads=n_heads, d_k=d_k,
                      tile_dst=256, tile_src=256)
    out = jax.block_until_ready(out)

    ref = reference_forward(h, adj_i8, params, n_heads=n_heads, d_k=d_k)
    assert out.shape == (N, out_dim)
    max_err = float(jnp.max(jnp.abs(out - ref)))
    # bf16 MXU inputs (~2^-9 relative per operand) + approx reciprocal
    # (~2^-12) vs. the f32 reference: expected max abs error ~1e-2.
    assert jnp.allclose(out, ref, atol=3e-2, rtol=3e-2), max_err

    print("KERNEL_OK")
</pallas_src>

<mosaic_0001>
module attributes {stable_mosaic.version = 11 : i64} {
  func.func @_proj_kernel(%arg0: i32, %arg1: memref<256x64xbf16, #tpu.memory_space<vmem>>, %arg2: memref<64x128xbf16, #tpu.memory_space<vmem>>, %arg3: memref<1x128xf32, #tpu.memory_space<vmem>>, %arg4: memref<64x64xbf16, #tpu.memory_space<vmem>>, %arg5: memref<1x64xf32, #tpu.memory_space<vmem>>, %arg6: memref<256x128xbf16, #tpu.memory_space<vmem>>, %arg7: memref<256x64xbf16, #tpu.memory_space<vmem>>) attributes {dimension_semantics = [#tpu.dimension_semantics<parallel>], iteration_bounds = array<i64: 2>, scalar_prefetch = 0 : i64, scratch_operands = 0 : i64, tpu.core_type = #tpu.core_type<tc>, window_params = [{transform_indices = @transform_0, window_bounds = array<i64: 256, 64>}, {pipeline_mode = #tpu.pipeline_mode<synchronous>, transform_indices = @transform_1, window_bounds = array<i64: 64, 128>}, {pipeline_mode = #tpu.pipeline_mode<synchronous>, transform_indices = @transform_2, window_bounds = array<i64: 1, 128>}, {pipeline_mode = #tpu.pipeline_mode<synchronous>, transform_indices = @transform_3, window_bounds = array<i64: 64, 64>}, {pipeline_mode = #tpu.pipeline_mode<synchronous>, transform_indices = @transform_4, window_bounds = array<i64: 1, 64>}, {transform_indices = @transform_5, window_bounds = array<i64: 256, 128>}, {transform_indices = @transform_6, window_bounds = array<i64: 256, 64>}]} {
    %c0 = arith.constant 0 : index
    %c0_0 = arith.constant 0 : index
    %0 = vector.load %arg1[%c0, %c0_0] : memref<256x64xbf16, #tpu.memory_space<vmem>>, vector<256x64xbf16>
    %c0_1 = arith.constant 0 : index
    %c0_2 = arith.constant 0 : index
    %1 = vector.load %arg2[%c0_1, %c0_2] : memref<64x128xbf16, #tpu.memory_space<vmem>>, vector<64x128xbf16>
    %cst = arith.constant dense<0.000000e+00> : vector<256x128xf32>
    %2 = tpu.matmul %0, %1, %cst {dimension_numbers = #tpu.dot_dimension_numbers<[1], [0], [0], [1], [0, 0, 1, 1], [], []>} : vector<256x64xbf16>, vector<64x128xbf16>, vector<256x128xf32> -> vector<256x128xf32>
    %c0_3 = arith.constant 0 : index
    %c0_4 = arith.constant 0 : index
    %3 = vector.load %arg3[%c0_3, %c0_4] : memref<1x128xf32, #tpu.memory_space<vmem>>, vector<1x128xf32>
    %4 = vector.broadcast %3 : vector<1x128xf32> to vector<256x128xf32>
    %5 = arith.addf %2, %4 : vector<256x128xf32>
    %c0_5 = arith.constant 0 : index
    %c0_6 = arith.constant 0 : index
    %6 = vector.load %arg4[%c0_5, %c0_6] : memref<64x64xbf16, #tpu.memory_space<vmem>>, vector<64x64xbf16>
    %cst_7 = arith.constant dense<0.000000e+00> : vector<256x64xf32>
    %7 = tpu.matmul %0, %6, %cst_7 {dimension_numbers = #tpu.dot_dimension_numbers<[1], [0], [0], [1], [0, 0, 1, 1], [], []>} : vector<256x64xbf16>, vector<64x64xbf16>, vector<256x64xf32> -> vector<256x64xf32>
    %c0_8 = arith.constant 0 : index
    %c0_9 = arith.constant 0 : index
    %8 = vector.load %arg5[%c0_8, %c0_9] : memref<1x64xf32, #tpu.memory_space<vmem>>, vector<1x64xf32>
    %9 = vector.broadcast %8 : vector<1x64xf32> to vector<256x64xf32>
    %10 = arith.addf %7, %9 : vector<256x64xf32>
    %11 = arith.truncf %5 : vector<256x128xf32> to vector<256x128xbf16>
    %c0_10 = arith.constant 0 : index
    %c0_11 = arith.constant 0 : index
    %12 = vector.load %arg6[%c0_10, %c0_11] : memref<256x128xbf16, #tpu.memory_space<vmem>>, vector<256x128xbf16>
    tpu.vector_store %arg6[%c0_10, %c0_11], %11 {strides = array<i32>} : memref<256x128xbf16, #tpu.memory_space<vmem>>, vector<256x128xbf16>,
    %13 = arith.truncf %10 : vector<256x64xf32> to vector<256x64xbf16>
    %c0_12 = arith.constant 0 : index
    %c0_13 = arith.constant 0 : index
    %14 = vector.load %arg7[%c0_12, %c0_13] : memref<256x64xbf16, #tpu.memory_space<vmem>>, vector<256x64xbf16>
    tpu.vector_store %arg7[%c0_12, %c0_13], %13 {strides = array<i32>} : memref<256x64xbf16, #tpu.memory_space<vmem>>, vector<256x64xbf16>,
    return
  }
  func.func @transform_0(%arg0: i32) -> (i32, i32) {
    %c0_i32 = arith.constant 0 : i32
    %c0_i32_0 = arith.constant 0 : i32
    return %arg0, %c0_i32 : i32, i32
  }
  func.func @transform_1(%arg0: i32) -> (i32, i32) {
    %c0_i32 = arith.constant 0 : i32
    %c0_i32_0 = arith.constant 0 : i32
    %c0_i32_1 = arith.constant 0 : i32
    return %c0_i32, %c0_i32_0 : i32, i32
  }
  func.func @transform_2(%arg0: i32) -> (i32, i32) {
    %c0_i32 = arith.constant 0 : i32
    %c0_i32_0 = arith.constant 0 : i32
    %c0_i32_1 = arith.constant 0 : i32
    return %c0_i32, %c0_i32_0 : i32, i32
  }
  func.func @transform_3(%arg0: i32) -> (i32, i32) {
    %c0_i32 = arith.constant 0 : i32
    %c0_i32_0 = arith.constant 0 : i32
    %c0_i32_1 = arith.constant 0 : i32
    return %c0_i32, %c0_i32_0 : i32, i32
  }
  func.func @transform_4(%arg0: i32) -> (i32, i32) {
    %c0_i32 = arith.constant 0 : i32
    %c0_i32_0 = arith.constant 0 : i32
    %c0_i32_1 = arith.constant 0 : i32
    return %c0_i32, %c0_i32_0 : i32, i32
  }
  func.func @transform_5(%arg0: i32) -> (i32, i32) {
    %c0_i32 = arith.constant 0 : i32
    %c0_i32_0 = arith.constant 0 : i32
    return %arg0, %c0_i32 : i32, i32
  }
  func.func @transform_6(%arg0: i32) -> (i32, i32) {
    %c0_i32 = arith.constant 0 : i32
    %c0_i32_0 = arith.constant 0 : i32
    return %arg0, %c0_i32 : i32, i32
  }
}

</mosaic_0001>

<llo_original>
// kernel: tpu_custom_call.1
$region0: #{tpu_custom_call.1}
  #allocation0 [shape = 'u32[]', space=smem, size = 0x4, offset = 0x4, fixed_abs, tag = 'smem constant byte address 0x4 - core index']
  #allocation1 [shape = 'u32[72,128]{1,0:T(1,128)}', space=vmem, size = 0x9000, scoped, tag = 'internal scratch']
  %s0 = inlined_call_operand.vmem [shape: bf16[512,64], index: 0, kind: input, shape index: {}]
  %s1 = inlined_call_operand.vmem [shape: bf16[64,128], index: 1, kind: input, shape index: {}]
  %s2 = inlined_call_operand.vmem [shape: f32[1,128], index: 2, kind: input, shape index: {}]
  %s3 = inlined_call_operand.vmem [shape: bf16[64,64], index: 3, kind: input, shape index: {}]
  %s4 = inlined_call_operand.vmem [shape: f32[1,64], index: 4, kind: input, shape index: {}]
  %s5 = inlined_call_operand.hbm [shape: bf16[512,128], index: 5, kind: output, shape index: {0}]
  %s6 = inlined_call_operand.vmem [shape: bf16[512,64], index: 6, kind: output, shape index: {1}]
  %7 = xla_tuple %s5, %s6
  %s8 = sld [smem:[#allocation0]]
  $region61: #{tpu_custom_call.1} parent=0
    _
  %s10 = ssub.s32 1, %s8
  %s11 = scalar_select 0, %s10, %s8
  $region1: #{tpu_custom_call.1} parent=0
    #allocation2 [shape = 'u8[131072]{0}', space=vmem, size = 0x20000, scoped, tag = 'output window, operand 0']
    #allocation3 [shape = 's32[2]{0}', space=sflag, size = 0x8, scoped, tag = 'scoped memory for tpu_custom_call.1']
    %12 = vsyncpa [#allocation3], 0
    %s13 = scalar_lea.sflag [#allocation3], 1
    %14 = vsyncpa %s13, 0
    loop: start=0, step=1, limit=4
    $region2: #{tpu_custom_call.1} parent=1 // loop_pre_header
      _
    $region3: #{tpu_custom_call.1} parent=1 // loop_header
      %s16 = sphi 0, %s20
      %p17 = scmp.ge.s32.totalorder %s16, 4
      %s26 = sphi 0, %s28
      %s29 = sphi 0, %s26
      %s30 = sphi 0, %s29
      %s46 = sphi 0, %s30
      %s50 = sphi 0, %s50
      %s52 = sphi 0, %s50
      %s53 = sphi 0, %s52
      %s67 = sphi 0, %s53
      %s71 = sphi 0, %s71
      %s73 = sphi 0, %s71
      %s74 = sphi 0, %s73
      %s88 = sphi 0, %s74
      %s92 = sphi 0, %s92
      %s94 = sphi 0, %s92
      %s95 = sphi 0, %s94
      %s109 = sphi 0, %s95
      %s113 = sphi 0, %s113
      %s115 = sphi 0, %s113
      %s116 = sphi 0, %s115
      %s130 = sphi 0, %s116
      %s136 = sphi 0, %s138
      %s139 = sphi 0, %s136
      %s140 = sphi 0, %s139
      %s156 = sphi 0, %s140
      %s162 = sphi 0, %s164
      %s165 = sphi 0, %s162
      %s166 = sphi 0, %s165
      %s182 = sphi 0, %s166
    $region4: #{tpu_custom_call.1} parent=1 // loop_header_branch
      %19 = sbr.rel (%p17) target = $region8
    $region5: #{tpu_custom_call.1} parent=1 // loop_body
      %s21 = ssub.s32 %s16, 1
      %s22 = ssub.s32 %s16, 2
      %s23 = sadd.s32 %s16, 1
      %s24 = ssub.s32 %s16, %s23
      %p25 = scmp.eq.s32.totalorder %s24, 0
      %s27 = sadd.s32 %s26, 1
      %s28 = scalar_select %p25, %s26, %s27
      %p31 = pneg %p25
      %p32 = scmp.eq.s32.totalorder %s16, 1
      %p33 = por %p31, %p32
      %p34 = scmp.ne.s32.totalorder %s26, %s29
      %p35 = scmp.eq.s32.totalorder %s16, 0
      %p36 = por %p34, %p35
      %p37 = scmp.ne.s32.totalorder %s26, %s29
      %p38 = scmp.eq.s32.totalorder %s21, 1
      %p39 = por %p37, %p38
      %p40 = scmp.ne.s32.totalorder %s29, %s30
      %p41 = scmp.eq.s32.totalorder %s21, 0
      %p42 = por %p40, %p41
      %p43 = scmp.ne.s32.totalorder %s29, %s30
      %p44 = scmp.eq.s32.totalorder %s22, 1
      %p45 = por %p43, %p44
      %p47 = scmp.ne.s32.totalorder %s30, %s46
      %p48 = scmp.eq.s32.totalorder %s22, 0
      %p49 = por %p47, %p48
      %s51 = sadd.s32 %s50, 1
      %p54 = scmp.eq.s32.totalorder %s16, 1
      %p55 = scmp.ne.s32.totalorder %s50, %s52
      %p56 = scmp.eq.s32.totalorder %s16, 0
      %p57 = por %p55, %p56
      %p58 = scmp.ne.s32.totalorder %s50, %s52
      %p59 = scmp.eq.s32.totalorder %s21, 1
      %p60 = por %p58, %p59
      %p61 = scmp.ne.s32.totalorder %s52, %s53
      %p62 = scmp.eq.s32.totalorder %s21, 0
      %p63 = por %p61, %p62
      %p64 = scmp.ne.s32.totalorder %s52, %s53
      %p65 = scmp.eq.s32.totalorder %s22, 1
      %p66 = por %p64, %p65
      %p68 = scmp.ne.s32.totalorder %s53, %s67
      %p69 = scmp.eq.s32.totalorder %s22, 0
      %p70 = por %p68, %p69
      %s72 = sadd.s32 %s71, 1
      %p75 = scmp.eq.s32.totalorder %s16, 1
      %p76 = scmp.ne.s32.totalorder %s71, %s73
      %p77 = scmp.eq.s32.totalorder %s16, 0
      %p78 = por %p76, %p77
      %p79 = scmp.ne.s32.totalorder %s71, %s73
      %p80 = scmp.eq.s32.totalorder %s21, 1
      %p81 = por %p79, %p80
      %p82 = scmp.ne.s32.totalorder %s73, %s74
      %p83 = scmp.eq.s32.totalorder %s21, 0
      %p84 = por %p82, %p83
      %p85 = scmp.ne.s32.totalorder %s73, %s74
      %p86 = scmp.eq.s32.totalorder %s22, 1
      %p87 = por %p85, %p86
      %p89 = scmp.ne.s32.totalorder %s74, %s88
      %p90 = scmp.eq.s32.totalorder %s22, 0
      %p91 = por %p89, %p90
      %s93 = sadd.s32 %s92, 1
      %p96 = scmp.eq.s32.totalorder %s16, 1
      %p97 = scmp.ne.s32.totalorder %s92, %s94
      %p98 = scmp.eq.s32.totalorder %s16, 0
      %p99 = por %p97, %p98
      %p100 = scmp.ne.s32.totalorder %s92, %s94
      %p101 = scmp.eq.s32.totalorder %s21, 1
      %p102 = por %p100, %p101
      %p103 = scmp.ne.s32.totalorder %s94, %s95
      %p104 = scmp.eq.s32.totalorder %s21, 0
      %p105 = por %p103, %p104
      %p106 = scmp.ne.s32.totalorder %s94, %s95
      %p107 = scmp.eq.s32.totalorder %s22, 1
      %p108 = por %p106, %p107
      %p110 = scmp.ne.s32.totalorder %s95, %s109
      %p111 = scmp.eq.s32.totalorder %s22, 0
      %p112 = por %p110, %p111
      %s114 = sadd.s32 %s113, 1
      %p117 = scmp.eq.s32.totalorder %s16, 1
      %p118 = scmp.ne.s32.totalorder %s113, %s115
      %p119 = scmp.eq.s32.totalorder %s16, 0
      %p120 = por %p118, %p119
      %p121 = scmp.ne.s32.totalorder %s113, %s115
      %p122 = scmp.eq.s32.totalorder %s21, 1
      %p123 = por %p121, %p122
      %p124 = scmp.ne.s32.totalorder %s115, %s116
      %p125 = scmp.eq.s32.totalorder %s21, 0
      %p126 = por %p124, %p125
      %p127 = scmp.ne.s32.totalorder %s115, %s116
      %p128 = scmp.eq.s32.totalorder %s22, 1
      %p129 = por %p127, %p128
      %p131 = scmp.ne.s32.totalorder %s116, %s130
      %p132 = scmp.eq.s32.totalorder %s22, 0
      %p133 = por %p131, %p132
      %s134 = ssub.s32 %s16, %s23
      %p135 = scmp.eq.s32.totalorder %s134, 0
      %s137 = sadd.s32 %s136, 1
      %s138 = scalar_select %p135, %s136, %s137
      %p141 = pneg %p135
      %p142 = scmp.eq.s32.totalorder %s16, 1
      %p143 = por %p141, %p142
      %p144 = scmp.ne.s32.totalorder %s136, %s139
      %p145 = scmp.eq.s32.totalorder %s16, 0
      %p146 = por %p144, %p145
      %p147 = scmp.ne.s32.totalorder %s136, %s139
      %p148 = scmp.eq.s32.totalorder %s21, 1
      %p149 = por %p147, %p148
      %p150 = scmp.ne.s32.totalorder %s139, %s140
      %p151 = scmp.eq.s32.totalorder %s21, 0
      %p152 = por %p150, %p151
      %p153 = scmp.ne.s32.totalorder %s139, %s140
      %p154 = scmp.eq.s32.totalorder %s22, 1
      %p155 = por %p153, %p154
      %p157 = scmp.ne.s32.totalorder %s140, %s156
      %p158 = scmp.eq.s32.totalorder %s22, 0
      %p159 = por %p157, %p158
      %s160 = ssub.s32 %s16, %s23
      %p161 = scmp.eq.s32.totalorder %s160, 0
      %s163 = sadd.s32 %s162, 1
      %s164 = scalar_select %p161, %s162, %s163
      %p167 = pneg %p161
      %p168 = scmp.eq.s32.totalorder %s16, 1
      %p169 = por %p167, %p168
      %p170 = scmp.ne.s32.totalorder %s162, %s165
      %p171 = scmp.eq.s32.totalorder %s16, 0
      %p172 = por %p170, %p171
      %p173 = scmp.ne.s32.totalorder %s162, %s165
      %p174 = scmp.eq.s32.totalorder %s21, 1
      %p175 = por %p173, %p174
      %p176 = scmp.ne.s32.totalorder %s165, %s166
      %p177 = scmp.eq.s32.totalorder %s21, 0
      %p178 = por %p176, %p177
      %p179 = scmp.ne.s32.totalorder %s165, %s166
      %p180 = scmp.eq.s32.totalorder %s22, 1
      %p181 = por %p179, %p180
      %p183 = scmp.ne.s32.totalorder %s166, %s182
      %p184 = scmp.eq.s32.totalorder %s22, 0
      %p185 = por %p183, %p184
      %p186 = scmp.le.s32.totalorder 1, %s16
      %p187 = scmp.lt.s32.totalorder %s16, 3
      %p188 = pnand %p186, %p187
      %p189 = pneg %p188
      // Predicated region
      $region9: #{tpu_custom_call.1} parent=5 // pred_check
        _
      $region10: #{tpu_custom_call.1} parent=5 // pred_check_branch
        %191 = sbr.rel (%p188) target = $region12
      $region11: #{tpu_custom_call.1} parent=5 // pred_region
        %s192 = ssub.s32 %s16, 1
        // Predicated region
        $region13: #{tpu_custom_call.1} parent=11 // pred_check
          %p193 = pneg %p63
        $region14: #{tpu_custom_call.1} parent=11 // pred_check_branch
          %195 = sbr.rel (%p193) target = $region16
        $region15: #{tpu_custom_call.1} parent=11 // pred_region
          _
        $region16: #{tpu_custom_call.1} parent=11 // pred_fallthru
          _
        // Predicated region
        $region17: #{tpu_custom_call.1} parent=11 // pred_check
          %p196 = pneg %p84
        $region18: #{tpu_custom_call.1} parent=11 // pred_check_branch
          %198 = sbr.rel (%p196) target = $region20
        $region19: #{tpu_custom_call.1} parent=11 // pred_region
          _
        $region20: #{tpu_custom_call.1} parent=11 // pred_fallthru
          _
        // Predicated region
        $region21: #{tpu_custom_call.1} parent=11 // pred_check
          %p199 = pneg %p105
        $region22: #{tpu_custom_call.1} parent=11 // pred_check_branch
          %201 = sbr.rel (%p199) target = $region24
        $region23: #{tpu_custom_call.1} parent=11 // pred_region
          _
        $region24: #{tpu_custom_call.1} parent=11 // pred_fallthru
          _
        // Predicated region
        $region25: #{tpu_custom_call.1} parent=11 // pred_check
          %p202 = pneg %p126
        $region26: #{tpu_custom_call.1} parent=11 // pred_check_branch
          %204 = sbr.rel (%p202) target = $region28
        $region27: #{tpu_custom_call.1} parent=11 // pred_region
          _
        $region28: #{tpu_custom_call.1} parent=11 // pred_fallthru
          _
      $region12: #{tpu_custom_call.1} parent=5 // pred_fallthru
        _
      %p205 = scmp.lt.s32.totalorder %s16, 2
      // Predicated region
      $region29: #{tpu_custom_call.1} parent=5 // pred_check
        %p206 = pneg %p205
      $region30: #{tpu_custom_call.1} parent=5 // pred_check_branch
        %208 = sbr.rel (%p206) target = $region32
      $region31: #{tpu_custom_call.1} parent=5 // pred_region
        // Predicated region
        $region33: #{tpu_custom_call.1} parent=31 // pred_check
          %p209 = pneg %p36
        $region34: #{tpu_custom_call.1} parent=31 // pred_check_branch
          %211 = sbr.rel (%p209) target = $region36
        $region35: #{tpu_custom_call.1} parent=31 // pred_region
          %s212 = smul.u32 32, %s16
          %p213 = scmp.lt.s32.totalorder %s212, 63
          %s214 = scalar_select %p213, %s212, 63
          %s215 = smul.addr %s214, 4
          %s216 = scalar_lea.vmem %s0, %s215
          %s217 = smul.u32 32, %s16
        $region36: #{tpu_custom_call.1} parent=31 // pred_fallthru
          _
      $region32: #{tpu_custom_call.1} parent=5 // pred_fallthru
        _
      %p218 = scmp.le.s32.totalorder 1, %s16
      %p219 = scmp.lt.s32.totalorder %s16, 3
      %p220 = pnand %p218, %p219
      %p221 = pneg %p220
      // Predicated region
      $region37: #{tpu_custom_call.1} parent=5 // pred_check
        _
      $region38: #{tpu_custom_call.1} parent=5 // pred_check_branch
        %223 = sbr.rel (%p220) target = $region40
      $region39: #{tpu_custom_call.1} parent=5 // pred_region
        %s224 = ssub.s32 %s16, 1
        %s225 = smul.u32 32, %s21
        %p226 = scmp.lt.s32.totalorder %s225, 63
        %s227 = scalar_select %p226, %s225, 63
        %s228 = smul.addr %s227, 4
        %s229 = scalar_lea.vmem %s0, %s228
        %p230 = pneg %p42
        %p231 = pneg %p39
        %p232 = pneg %p63
        %p233 = pneg %p60
        %p234 = pneg %p84
        %p235 = pneg %p81
        %p236 = pneg %p105
        %p237 = pneg %p102
        %p238 = pneg %p126
        %p239 = pneg %p123
        %p240 = pneg %p152
        %p241 = pneg %p149
        %s242 = sand.u32 %s139, 1
        %s243 = scalar_lea.sflag [#allocation3], %s242
        %s244 = sand.u32 %s139, 1
        %s245 = smul.addr %s244, 128
        %s246 = scalar_lea.vmem [#allocation2], %s245
        %p247 = pneg %p178
        %p248 = pneg %p175
        %s249 = smul.u32 32, %s21
        %p250 = scmp.lt.s32.totalorder %s249, 63
        %s251 = scalar_select %p250, %s249, 63
        %s252 = smul.addr %s251, 4
        %s253 = scalar_lea.vmem %s6, %s252
        %s254 = smul.u32 32, %s21
        %p255 = scmp.lt.s32.totalorder %s254, 63
        %s256 = scalar_select %p255, %s254, 63
        %s257 = smul.addr %s256, 4
        %s258 = scalar_lea.vmem %s0, %s257
        %s259 = smul.u32 32, %s21
        %s260 = smul.u32 32, %s21
        %s261 = smul.u32 32, %s21
        %p262 = scmp.lt.s32.totalorder %s261, 63
        %s263 = scalar_select %p262, %s261, 63
        %s264 = smul.addr %s263, 4
        %s265 = scalar_lea.vmem %s6, %s264
        %s266 = smul.u32 32, %s21
        %v268 = vld [vmem:[%s258] sm:$0xf]
        %v269 = vld [vmem:[%s258 + $0x4] sm:$0xf]
        %v270 = vld [vmem:[%s258 + $0x8] sm:$0xf]
        %v271 = vld [vmem:[%s258 + $0xc] sm:$0xf]
        %v272 = vld [vmem:[%s258 + $0x10] sm:$0xf]
        %v273 = vld [vmem:[%s258 + $0x14] sm:$0xf]
        %v274 = vld [vmem:[%s258 + $0x18] sm:$0xf]
        %v275 = vld [vmem:[%s258 + $0x1c] sm:$0xf]
        %v276 = vld [vmem:[%s258 + $0x20] sm:$0xf]
        %v277 = vld [vmem:[%s258 + $0x24] sm:$0xf]
        %v278 = vld [vmem:[%s258 + $0x28] sm:$0xf]
        %v279 = vld [vmem:[%s258 + $0x2c] sm:$0xf]
        %v280 = vld [vmem:[%s258 + $0x30] sm:$0xf]
        %v281 = vld [vmem:[%s258 + $0x34] sm:$0xf]
        %v282 = vld [vmem:[%s258 + $0x38] sm:$0xf]
        %v283 = vld [vmem:[%s258 + $0x3c] sm:$0xf]
        %v284 = vld [vmem:[%s258 + $0x40] sm:$0xf]
        %v285 = vld [vmem:[%s258 + $0x44] sm:$0xf]
        %v286 = vld [vmem:[%s258 + $0x48] sm:$0xf]
        %v287 = vld [vmem:[%s258 + $0x4c] sm:$0xf]
        %v288 = vld [vmem:[%s258 + $0x50] sm:$0xf]
        %v289 = vld [vmem:[%s258 + $0x54] sm:$0xf]
        %v290 = vld [vmem:[%s258 + $0x58] sm:$0xf]
        %v291 = vld [vmem:[%s258 + $0x5c] sm:$0xf]
        %v292 = vld [vmem:[%s258 + $0x60] sm:$0xf]
        %v293 = vld [vmem:[%s258 + $0x64] sm:$0xf]
        %v294 = vld [vmem:[%s258 + $0x68] sm:$0xf]
        %v295 = vld [vmem:[%s258 + $0x6c] sm:$0xf]
        %v296 = vld [vmem:[%s258 + $0x70] sm:$0xf]
        %v297 = vld [vmem:[%s258 + $0x74] sm:$0xf]
        %v298 = vld [vmem:[%s258 + $0x78] sm:$0xf]
        %v299 = vld [vmem:[%s258 + $0x7c] sm:$0xf]
        %v300 = vld [vmem:[%s1] sm:$0xf]
        %v301 = vld [vmem:[%s1 + $0x4] sm:$0xf]
        %v302 = vld [vmem:[%s1 + $0x8] sm:$0xf]
        %v303 = vld [vmem:[%s1 + $0xc] sm:$0xf]
        %v304 = vld [vmem:[%s1 + $0x10] sm:$0xf]
        %v305 = vld [vmem:[%s1 + $0x14] sm:$0xf]
        %v306 = vld [vmem:[%s1 + $0x18] sm:$0xf]
        %v307 = vld [vmem:[%s1 + $0x1c] sm:$0xf]
        %v308 = vld [vmem:[%s2] sm:$0x1]
        %v310 = vperm.slane %v308, 0
        %v344 = vunpack.c.l.b16 %v268
        %v345 = vunpack.c.l.b16 %v269
        %v346 = vunpack.c.l.b16 %v270
        %v347 = vunpack.c.l.b16 %v271
        %v348 = vunpack.c.l.b16 %v272
        %v349 = vunpack.c.l.b16 %v273
        %v350 = vunpack.c.l.b16 %v274
        %v351 = vunpack.c.l.b16 %v275
        %v352 = vunpack.c.l.b16 %v276
        %v353 = vunpack.c.l.b16 %v277
        %v354 = vunpack.c.l.b16 %v278
        %v355 = vunpack.c.l.b16 %v279
        %v356 = vunpack.c.l.b16 %v280
        %v357 = vunpack.c.l.b16 %v281
        %v358 = vunpack.c.l.b16 %v282
        %v359 = vunpack.c.l.b16 %v283
        %v360 = vunpack.c.l.b16 %v284
        %v361 = vunpack.c.l.b16 %v285
        %v362 = vunpack.c.l.b16 %v286
        %v363 = vunpack.c.l.b16 %v287
        %v364 = vunpack.c.l.b16 %v288
        %v365 = vunpack.c.l.b16 %v289
        %v366 = vunpack.c.l.b16 %v290
        %v367 = vunpack.c.l.b16 %v291
        %v368 = vunpack.c.l.b16 %v292
        %v369 = vunpack.c.l.b16 %v293
        %v370 = vunpack.c.l.b16 %v294
        %v371 = vunpack.c.l.b16 %v295
        %v372 = vunpack.c.l.b16 %v296
        %v373 = vunpack.c.l.b16 %v297
        %v374 = vunpack.c.l.b16 %v298
        %v375 = vunpack.c.l.b16 %v299
        %v376 = vpack.c.b16 %v345, %v344
        %v377 = vpack.c.b16 %v347, %v346
        %v378 = vpack.c.b16 %v349, %v348
        %v379 = vpack.c.b16 %v351, %v350
        %v380 = vpack.c.b16 %v353, %v352
        %v381 = vpack.c.b16 %v355, %v354
        %v382 = vpack.c.b16 %v357, %v356
        %v383 = vpack.c.b16 %v359, %v358
        %v384 = vpack.c.b16 %v361, %v360
        %v385 = vpack.c.b16 %v363, %v362
        %v386 = vpack.c.b16 %v365, %v364
        %v387 = vpack.c.b16 %v367, %v366
        %v388 = vpack.c.b16 %v369, %v368
        %v389 = vpack.c.b16 %v371, %v370
        %v390 = vpack.c.b16 %v373, %v372
        %v391 = vpack.c.b16 %v375, %v374
        %v400 = vunpack.c.l.b16 %v300
        %v401 = vunpack.c.l.b16 %v301
        %v402 = vunpack.c.l.b16 %v302
        %v403 = vunpack.c.l.b16 %v303
        %v404 = vunpack.c.l.b16 %v304
        %v405 = vunpack.c.l.b16 %v305
        %v406 = vunpack.c.l.b16 %v306
        %v407 = vunpack.c.l.b16 %v307
        %v408 = vpack.c.b16 %v401, %v400
        %v409 = vpack.c.b16 %v403, %v402
        %v410 = vpack.c.b16 %v405, %v404
        %v411 = vpack.c.b16 %v407, %v406
        %vm416 = vcmask 523264
        %v418 = vsel %vm416, %v376, 0
        %v421 = vsel %vm416, %v377, 0
        %v424 = vsel %vm416, %v378, 0
        %v427 = vsel %vm416, %v379, 0
        %v430 = vsel %vm416, %v380, 0
        %v433 = vsel %vm416, %v381, 0
        %v436 = vsel %vm416, %v382, 0
        %v439 = vsel %vm416, %v383, 0
        %v442 = vsel %vm416, %v384, 0
        %v445 = vsel %vm416, %v385, 0
        %v448 = vsel %vm416, %v386, 0
        %v451 = vsel %vm416, %v387, 0
        %v454 = vsel %vm416, %v388, 0
        %v457 = vsel %vm416, %v389, 0
        %v460 = vsel %vm416, %v390, 0
        %v463 = vsel %vm416, %v391, 0
        %465 = vmatpush.bf16.msra.mxu0 0
        %466 = vmatpush.bf16.msra.mxu0 0
        %467 = vmatpush.bf16.msra.mxu0 0
        %468 = vmatpush.bf16.msra.mxu0 0
        %469 = vmatpush.bf16.msra.mxu0 %v411
        %470 = vmatpush.bf16.msra.mxu0 %v410
        %471 = vmatpush.bf16.msra.mxu0 %v409
        %472 = vmatpush.bf16.msra.mxu0 %v408
        %473 = vmatmul.bf16.gmra.mxu0 %v418
        %v474 = vpop.f32.mrf.mxu0
        %v475 = vadd.f32 %v310, %v474
        %v476 = vpop.f32.mrf.mxu0
        %v477 = vadd.f32 %v310, %v476
        %478 = vmatmul.bf16.gmra.mxu0 %v421
        %v479 = vpop.f32.mrf.mxu0
        %v480 = vadd.f32 %v310, %v479
        %v481 = vpop.f32.mrf.mxu0
        %v482 = vadd.f32 %v310, %v481
        %483 = vmatmul.bf16.gmra.mxu0 %v424
        %v484 = vpop.f32.mrf.mxu0
        %v485 = vadd.f32 %v310, %v484
        %v486 = vpop.f32.mrf.mxu0
        %v487 = vadd.f32 %v310, %v486
        %488 = vmatmul.bf16.gmra.mxu0 %v427
        %v489 = vpop.f32.mrf.mxu0
        %v490 = vadd.f32 %v310, %v489
        %v491 = vpop.f32.mrf.mxu0
        %v492 = vadd.f32 %v310, %v491
        %493 = vmatmul.bf16.gmra.mxu0 %v430
        %v494 = vpop.f32.mrf.mxu0
        %v495 = vadd.f32 %v310, %v494
        %v496 = vpop.f32.mrf.mxu0
        %v497 = vadd.f32 %v310, %v496
        %498 = vmatmul.bf16.gmra.mxu0 %v433
        %v499 = vpop.f32.mrf.mxu0
        %v500 = vadd.f32 %v310, %v499
        %v501 = vpop.f32.mrf.mxu0
        %v502 = vadd.f32 %v310, %v501
        %503 = vmatmul.bf16.gmra.mxu0 %v436
        %v504 = vpop.f32.mrf.mxu0
        %v505 = vadd.f32 %v310, %v504
        %v506 = vpop.f32.mrf.mxu0
        %v507 = vadd.f32 %v310, %v506
        %508 = vmatmul.bf16.gmra.mxu0 %v439
        %v509 = vpop.f32.mrf.mxu0
        %v510 = vadd.f32 %v310, %v509
        %v511 = vpop.f32.mrf.mxu0
        %v512 = vadd.f32 %v310, %v511
        %513 = vmatmul.bf16.gmra.mxu0 %v442
        %v514 = vpop.f32.mrf.mxu0
        %v515 = vadd.f32 %v310, %v514
        %v516 = vpop.f32.mrf.mxu0
        %v517 = vadd.f32 %v310, %v516
        %518 = vmatmul.bf16.gmra.mxu0 %v445
        %v519 = vpop.f32.mrf.mxu0
        %v520 = vadd.f32 %v310, %v519
        %v521 = vpop.f32.mrf.mxu0
        %v522 = vadd.f32 %v310, %v521
        %523 = vmatmul.bf16.gmra.mxu0 %v448
        %v524 = vpop.f32.mrf.mxu0
        %v525 = vadd.f32 %v310, %v524
        %v526 = vpop.f32.mrf.mxu0
        %v527 = vadd.f32 %v310, %v526
        %528 = vmatmul.bf16.gmra.mxu0 %v451
        %v529 = vpop.f32.mrf.mxu0
        %v530 = vadd.f32 %v310, %v529
        %v531 = vpop.f32.mrf.mxu0
        %v532 = vadd.f32 %v310, %v531
        %533 = vmatmul.bf16.gmra.mxu0 %v454
        %v534 = vpop.f32.mrf.mxu0
        %v535 = vadd.f32 %v310, %v534
        %v536 = vpop.f32.mrf.mxu0
        %v537 = vadd.f32 %v310, %v536
        %538 = vmatmul.bf16.gmra.mxu0 %v457
        %v539 = vpop.f32.mrf.mxu0
        %v540 = vadd.f32 %v310, %v539
        %v541 = vpop.f32.mrf.mxu0
        %v542 = vadd.f32 %v310, %v541
        %543 = vmatmul.bf16.gmra.mxu0 %v460
        %v544 = vpop.f32.mrf.mxu0
        %v545 = vadd.f32 %v310, %v544
        %v546 = vpop.f32.mrf.mxu0
        %v547 = vadd.f32 %v310, %v546
        %548 = vmatmul.bf16.gmra.mxu0 %v463
        %v549 = vpop.f32.mrf.mxu0
        %v550 = vadd.f32 %v310, %v549
        %v551 = vpop.f32.mrf.mxu0
        %v552 = vadd.f32 %v310, %v551
        %553 = vdwg.mxu0
        %v554 = vld [vmem:[%s3] sm:$0xf]
        %v555 = vld [vmem:[%s3 + $0x4] sm:$0xf]
        %v556 = vld [vmem:[%s3 + $0x8] sm:$0xf]
        %v557 = vld [vmem:[%s3 + $0xc] sm:$0xf]
        %v558 = vld [vmem:[%s3 + $0x10] sm:$0xf]
        %v559 = vld [vmem:[%s3 + $0x14] sm:$0xf]
        %v560 = vld [vmem:[%s3 + $0x18] sm:$0xf]
        %v561 = vld [vmem:[%s3 + $0x1c] sm:$0xf]
        %v562 = vld [vmem:[%s4] sm:$0x1]
        %v564 = vperm.slane %v562, 0
        %v574 = vunpack.c.l.b16 %v554
        %v575 = vunpack.c.l.b16 %v555
        %v576 = vunpack.c.l.b16 %v556
        %v577 = vunpack.c.l.b16 %v557
        %v578 = vunpack.c.l.b16 %v558
        %v579 = vunpack.c.l.b16 %v559
        %v580 = vunpack.c.l.b16 %v560
        %v581 = vunpack.c.l.b16 %v561
        %v582 = vpack.c.b16 %v575, %v574
        %v583 = vpack.c.b16 %v577, %v576
        %v584 = vpack.c.b16 %v579, %v578
        %v585 = vpack.c.b16 %v581, %v580
        %590 = vmatpush.bf16.msra.mxu0 0
        %591 = vmatpush.bf16.msra.mxu0 0
        %592 = vmatpush.bf16.msra.mxu0 0
        %593 = vmatpush.bf16.msra.mxu0 0
        %594 = vmatpush.bf16.msra.mxu0 %v585
        %595 = vmatpush.bf16.msra.mxu0 %v584
        %596 = vmatpush.bf16.msra.mxu0 %v583
        %597 = vmatpush.bf16.msra.mxu0 %v582
        %598 = vmatmul.bf16.gmra.mxu0 %v418
        %v599 = vpop.f32.mrf.mxu0
        %v600 = vadd.f32 %v564, %v599
        %v601 = vpop.f32.mrf.mxu0
        %v602 = vadd.f32 %v564, %v601
        %603 = vmatmul.bf16.gmra.mxu0 %v421
        %v604 = vpop.f32.mrf.mxu0
        %v605 = vadd.f32 %v564, %v604
        %v606 = vpop.f32.mrf.mxu0
        %v607 = vadd.f32 %v564, %v606
        %608 = vmatmul.bf16.gmra.mxu0 %v424
        %v609 = vpop.f32.mrf.mxu0
        %v610 = vadd.f32 %v564, %v609
        %v611 = vpop.f32.mrf.mxu0
        %v612 = vadd.f32 %v564, %v611
        %613 = vmatmul.bf16.gmra.mxu0 %v427
        %v614 = vpop.f32.mrf.mxu0
        %v615 = vadd.f32 %v564, %v614
        %v616 = vpop.f32.mrf.mxu0
        %v617 = vadd.f32 %v564, %v616
        %618 = vmatmul.bf16.gmra.mxu0 %v430
        %v619 = vpop.f32.mrf.mxu0
        %v620 = vadd.f32 %v564, %v619
        %v621 = vpop.f32.mrf.mxu0
        %v622 = vadd.f32 %v564, %v621
        %623 = vmatmul.bf16.gmra.mxu0 %v433
        %v624 = vpop.f32.mrf.mxu0
        %v625 = vadd.f32 %v564, %v624
        %v626 = vpop.f32.mrf.mxu0
        %v627 = vadd.f32 %v564, %v626
        %628 = vmatmul.bf16.gmra.mxu0 %v436
        %v629 = vpop.f32.mrf.mxu0
        %v630 = vadd.f32 %v564, %v629
        %v631 = vpop.f32.mrf.mxu0
        %v632 = vadd.f32 %v564, %v631
        %633 = vmatmul.bf16.gmra.mxu0 %v439
        %v634 = vpop.f32.mrf.mxu0
        %v635 = vadd.f32 %v564, %v634
        %v636 = vpop.f32.mrf.mxu0
        %v637 = vadd.f32 %v564, %v636
        %638 = vmatmul.bf16.gmra.mxu0 %v442
        %v639 = vpop.f32.mrf.mxu0
        %v640 = vadd.f32 %v564, %v639
        %v641 = vpop.f32.mrf.mxu0
        %v642 = vadd.f32 %v564, %v641
        %643 = vmatmul.bf16.gmra.mxu0 %v445
        %v644 = vpop.f32.mrf.mxu0
        %v645 = vadd.f32 %v564, %v644
        %v646 = vpop.f32.mrf.mxu0
        %v647 = vadd.f32 %v564, %v646
        %648 = vmatmul.bf16.gmra.mxu0 %v448
        %v649 = vpop.f32.mrf.mxu0
        %v650 = vadd.f32 %v564, %v649
        %v651 = vpop.f32.mrf.mxu0
        %v652 = vadd.f32 %v564, %v651
        %653 = vmatmul.bf16.gmra.mxu0 %v451
        %v654 = vpop.f32.mrf.mxu0
        %v655 = vadd.f32 %v564, %v654
        %v656 = vpop.f32.mrf.mxu0
        %v657 = vadd.f32 %v564, %v656
        %658 = vmatmul.bf16.gmra.mxu0 %v454
        %v659 = vpop.f32.mrf.mxu0
        %v660 = vadd.f32 %v564, %v659
        %v661 = vpop.f32.mrf.mxu0
        %v662 = vadd.f32 %v564, %v661
        %663 = vmatmul.bf16.gmra.mxu0 %v457
        %v664 = vpop.f32.mrf.mxu0
        %v665 = vadd.f32 %v564, %v664
        %v666 = vpop.f32.mrf.mxu0
        %v667 = vadd.f32 %v564, %v666
        %668 = vmatmul.bf16.gmra.mxu0 %v460
        %v669 = vpop.f32.mrf.mxu0
        %v670 = vadd.f32 %v564, %v669
        %v671 = vpop.f32.mrf.mxu0
        %v672 = vadd.f32 %v564, %v671
        %673 = vmatmul.bf16.gmra.mxu0 %v463
        %v674 = vpop.f32.mrf.mxu0
        %v675 = vadd.f32 %v564, %v674
        %v676 = vpop.f32.mrf.mxu0
        %v677 = vadd.f32 %v564, %v676
        %678 = vdwg.mxu0
        %v679 = vpack.c.bf16 %v475, %v475
        %v680 = vpack.c.bf16 %v477, %v477
        %v681 = vpack.c.bf16 %v480, %v480
        %v682 = vpack.c.bf16 %v482, %v482
        %v683 = vpack.c.bf16 %v485, %v485
        %v684 = vpack.c.bf16 %v487, %v487
        %v685 = vpack.c.bf16 %v490, %v490
        %v686 = vpack.c.bf16 %v492, %v492
        %v687 = vpack.c.bf16 %v495, %v495
        %v688 = vpack.c.bf16 %v497, %v497
        %v689 = vpack.c.bf16 %v500, %v500
        %v690 = vpack.c.bf16 %v502, %v502
        %v691 = vpack.c.bf16 %v505, %v505
        %v692 = vpack.c.bf16 %v507, %v507
        %v693 = vpack.c.bf16 %v510, %v510
        %v694 = vpack.c.bf16 %v512, %v512
        %v695 = vpack.c.bf16 %v515, %v515
        %v696 = vpack.c.bf16 %v517, %v517
        %v697 = vpack.c.bf16 %v520, %v520
        %v698 = vpack.c.bf16 %v522, %v522
        %v699 = vpack.c.bf16 %v525, %v525
        %v700 = vpack.c.bf16 %v527, %v527
        %v701 = vpack.c.bf16 %v530, %v530
        %v702 = vpack.c.bf16 %v532, %v532
        %v703 = vpack.c.bf16 %v535, %v535
        %v704 = vpack.c.bf16 %v537, %v537
        %v705 = vpack.c.bf16 %v540, %v540
        %v706 = vpack.c.bf16 %v542, %v542
        %v707 = vpack.c.bf16 %v545, %v545
        %v708 = vpack.c.bf16 %v547, %v547
        %v709 = vpack.c.bf16 %v550, %v550
        %v710 = vpack.c.bf16 %v552, %v552
        %711 = vst [vmem:[%s246] sm:$0xf] %v679
        %712 = vst [vmem:[%s246 + $0x4] sm:$0xf] %v680
        %713 = vst [vmem:[%s246 + $0x8] sm:$0xf] %v681
        %714 = vst [vmem:[%s246 + $0xc] sm:$0xf] %v682
        %715 = vst [vmem:[%s246 + $0x10] sm:$0xf] %v683
        %716 = vst [vmem:[%s246 + $0x14] sm:$0xf] %v684
        %717 = vst [vmem:[%s246 + $0x18] sm:$0xf] %v685
        %718 = vst [vmem:[%s246 + $0x1c] sm:$0xf] %v686
        %719 = vst [vmem:[%s246 + $0x20] sm:$0xf] %v687
        %720 = vst [vmem:[%s246 + $0x24] sm:$0xf] %v688
        %721 = vst [vmem:[%s246 + $0x28] sm:$0xf] %v689
        %722 = vst [vmem:[%s246 + $0x2c] sm:$0xf] %v690
        %723 = vst [vmem:[%s246 + $0x30] sm:$0xf] %v691
        %724 = vst [vmem:[%s246 + $0x34] sm:$0xf] %v692
        %725 = vst [vmem:[%s246 + $0x38] sm:$0xf] %v693
        %726 = vst [vmem:[%s246 + $0x3c] sm:$0xf] %v694
        %727 = vst [vmem:[%s246 + $0x40] sm:$0xf] %v695
        %728 = vst [vmem:[%s246 + $0x44] sm:$0xf] %v696
        %729 = vst [vmem:[%s246 + $0x48] sm:$0xf] %v697
        %730 = vst [vmem:[%s246 + $0x4c] sm:$0xf] %v698
        %731 = vst [vmem:[%s246 + $0x50] sm:$0xf] %v699
        %732 = vst [vmem:[%s246 + $0x54] sm:$0xf] %v700
        %733 = vst [vmem:[%s246 + $0x58] sm:$0xf] %v701
        %734 = vst [vmem:[%s246 + $0x5c] sm:$0xf] %v702
        %735 = vst [vmem:[%s246 + $0x60] sm:$0xf] %v703
        %736 = vst [vmem:[%s246 + $0x64] sm:$0xf] %v704
        %737 = vst [vmem:[%s246 + $0x68] sm:$0xf] %v705
        %738 = vst [vmem:[%s246 + $0x6c] sm:$0xf] %v706
        %739 = vst [vmem:[%s246 + $0x70] sm:$0xf] %v707
        %740 = vst [vmem:[%s246 + $0x74] sm:$0xf] %v708
        %741 = vst [vmem:[%s246 + $0x78] sm:$0xf] %v709
        %742 = vst [vmem:[%s246 + $0x7c] sm:$0xf] %v710
        %v743 = vpack.c.bf16 %v600, %v600
        %v744 = vpack.c.bf16 %v602, %v602
        %v745 = vpack.c.bf16 %v605, %v605
        %v746 = vpack.c.bf16 %v607, %v607
        %v747 = vpack.c.bf16 %v610, %v610
        %v748 = vpack.c.bf16 %v612, %v612
        %v749 = vpack.c.bf16 %v615, %v615
        %v750 = vpack.c.bf16 %v617, %v617
        %v751 = vpack.c.bf16 %v620, %v620
        %v752 = vpack.c.bf16 %v622, %v622
        %v753 = vpack.c.bf16 %v625, %v625
        %v754 = vpack.c.bf16 %v627, %v627
        %v755 = vpack.c.bf16 %v630, %v630
        %v756 = vpack.c.bf16 %v632, %v632
        %v757 = vpack.c.bf16 %v635, %v635
        %v758 = vpack.c.bf16 %v637, %v637
        %v759 = vpack.c.bf16 %v640, %v640
        %v760 = vpack.c.bf16 %v642, %v642
        %v761 = vpack.c.bf16 %v645, %v645
        %v762 = vpack.c.bf16 %v647, %v647
        %v763 = vpack.c.bf16 %v650, %v650
        %v764 = vpack.c.bf16 %v652, %v652
        %v765 = vpack.c.bf16 %v655, %v655
        %v766 = vpack.c.bf16 %v657, %v657
        %v767 = vpack.c.bf16 %v660, %v660
        %v768 = vpack.c.bf16 %v662, %v662
        %v769 = vpack.c.bf16 %v665, %v665
        %v770 = vpack.c.bf16 %v667, %v667
        %v771 = vpack.c.bf16 %v670, %v670
        %v772 = vpack.c.bf16 %v672, %v672
        %v773 = vpack.c.bf16 %v675, %v675
        %v774 = vpack.c.bf16 %v677, %v677
        %vm775 = vcmask 519168
        %776 = vst.msk [vmem:[%s265] sm:$0xf] %vm775, %v743
        %777 = vst.msk [vmem:[%s265 + $0x4] sm:$0xf] %vm775, %v744
        %778 = vst.msk [vmem:[%s265 + $0x8] sm:$0xf] %vm775, %v745
        %779 = vst.msk [vmem:[%s265 + $0xc] sm:$0xf] %vm775, %v746
        %780 = vst.msk [vmem:[%s265 + $0x10] sm:$0xf] %vm775, %v747
        %781 = vst.msk [vmem:[%s265 + $0x14] sm:$0xf] %vm775, %v748
        %782 = vst.msk [vmem:[%s265 + $0x18] sm:$0xf] %vm775, %v749
        %783 = vst.msk [vmem:[%s265 + $0x1c] sm:$0xf] %vm775, %v750
        %784 = vst.msk [vmem:[%s265 + $0x20] sm:$0xf] %vm775, %v751
        %785 = vst.msk [vmem:[%s265 + $0x24] sm:$0xf] %vm775, %v752
        %786 = vst.msk [vmem:[%s265 + $0x28] sm:$0xf] %vm775, %v753
        %787 = vst.msk [vmem:[%s265 + $0x2c] sm:$0xf] %vm775, %v754
        %788 = vst.msk [vmem:[%s265 + $0x30] sm:$0xf] %vm775, %v755
        %789 = vst.msk [vmem:[%s265 + $0x34] sm:$0xf] %vm775, %v756
        %790 = vst.msk [vmem:[%s265 + $0x38] sm:$0xf] %vm775, %v757
        %791 = vst.msk [vmem:[%s265 + $0x3c] sm:$0xf] %vm775, %v758
        %792 = vst.msk [vmem:[%s265 + $0x40] sm:$0xf] %vm775, %v759
        %793 = vst.msk [vmem:[%s265 + $0x44] sm:$0xf] %vm775, %v760
        %794 = vst.msk [vmem:[%s265 + $0x48] sm:$0xf] %vm775, %v761
        %795 = vst.msk [vmem:[%s265 + $0x4c] sm:$0xf] %vm775, %v762
        %796 = vst.msk [vmem:[%s265 + $0x50] sm:$0xf] %vm775, %v763
        %797 = vst.msk [vmem:[%s265 + $0x54] sm:$0xf] %vm775, %v764
        %798 = vst.msk [vmem:[%s265 + $0x58] sm:$0xf] %vm775, %v765
        %799 = vst.msk [vmem:[%s265 + $0x5c] sm:$0xf] %vm775, %v766
        %800 = vst.msk [vmem:[%s265 + $0x60] sm:$0xf] %vm775, %v767
        %801 = vst.msk [vmem:[%s265 + $0x64] sm:$0xf] %vm775, %v768
        %802 = vst.msk [vmem:[%s265 + $0x68] sm:$0xf] %vm775, %v769
        %803 = vst.msk [vmem:[%s265 + $0x6c] sm:$0xf] %vm775, %v770
        %804 = vst.msk [vmem:[%s265 + $0x70] sm:$0xf] %vm775, %v771
        %805 = vst.msk [vmem:[%s265 + $0x74] sm:$0xf] %vm775, %v772
        %806 = vst.msk [vmem:[%s265 + $0x78] sm:$0xf] %vm775, %v773
        %807 = vst.msk [vmem:[%s265 + $0x7c] sm:$0xf] %vm775, %v774
        %s808 = sand.u32 %s139, 1
        %s809 = scalar_lea.sflag [#allocation3], %s808
        %s810 = sand.u32 %s139, 1
        %s811 = smul.addr %s810, 128
        %s812 = scalar_lea.vmem [#allocation2], %s811
        %s813 = smul.u32 32, %s21
        %p814 = scmp.lt.s32.totalorder %s813, 63
        %s815 = scalar_select %p814, %s813, 63
        %s816 = smul.addr %s815, 4
        %s817 = scalar_lea.vmem %s6, %s816
        // Predicated region
        $region41: #{tpu_custom_call.1} parent=39 // pred_check
          %p818 = pneg %p149
        $region42: #{tpu_custom_call.1} parent=39 // pred_check_branch
          %820 = sbr.rel (%p818) target = $region44
        $region43: #{tpu_custom_call.1} parent=39 // pred_region
          %s821 = smul.u32 32, %s21
          %823 = vsyncadd %s809, 0
          %s824 = smul.addr %s821, 4
          %s825 = scalar_lea.hbm %s5, %s824
          %s826 = sshll.u32 %s812, 4
          %s827 = int_to_ptr.vmem [resolvable:$true] %s826
          %s828 = sshll.u32 %s825, 4
          %s829 = int_to_ptr.hbm [resolvable:$true] %s828
          %834 = dma.vmem_to_hbm [thread:$0]  %s827, 2048, %s829, %s809, 64, 64, 4
        $region44: #{tpu_custom_call.1} parent=39 // pred_fallthru
          _
        // Predicated region
        $region45: #{tpu_custom_call.1} parent=39 // pred_check
          %p835 = pneg %p175
        $region46: #{tpu_custom_call.1} parent=39 // pred_check_branch
          %837 = sbr.rel (%p835) target = $region48
        $region47: #{tpu_custom_call.1} parent=39 // pred_region
          %s838 = smul.u32 32, %s21
        $region48: #{tpu_custom_call.1} parent=39 // pred_fallthru
          _
      $region40: #{tpu_custom_call.1} parent=5 // pred_fallthru
        _
      %p839 = scmp.le.s32.totalorder 2, %s16
      // Predicated region
      $region49: #{tpu_custom_call.1} parent=5 // pred_check
        %p840 = pneg %p839
      $region50: #{tpu_custom_call.1} parent=5 // pred_check_branch
        %842 = sbr.rel (%p840) target = $region52
      $region51: #{tpu_custom_call.1} parent=5 // pred_region
        %s843 = ssub.s32 %s16, 2
        // Predicated region
        $region53: #{tpu_custom_call.1} parent=51 // pred_check
          %p844 = pneg %p155
        $region54: #{tpu_custom_call.1} parent=51 // pred_check_branch
          %846 = sbr.rel (%p844) target = $region56
        $region55: #{tpu_custom_call.1} parent=51 // pred_region
          %s847 = sand.u32 %s140, 1
          %s848 = scalar_lea.sflag [#allocation3], %s847
          %s849 = sand.u32 %s140, 1
          %s850 = smul.addr %s849, 128
          %s851 = scalar_lea.vmem [#allocation2], %s850
          %853 = dma.done %s848, 2048
        $region56: #{tpu_custom_call.1} parent=51 // pred_fallthru
          _
        // Predicated region
        $region57: #{tpu_custom_call.1} parent=51 // pred_check
          %p854 = pneg %p181
        $region58: #{tpu_custom_call.1} parent=51 // pred_check_branch
          %856 = sbr.rel (%p854) target = $region60
        $region59: #{tpu_custom_call.1} parent=51 // pred_region
          %s857 = smul.u32 32, %s22
          %p858 = scmp.lt.s32.totalorder %s857, 63
          %s859 = scalar_select %p858, %s857, 63
          %s860 = smul.addr %s859, 4
          %s861 = scalar_lea.vmem %s6, %s860
        $region60: #{tpu_custom_call.1} parent=51 // pred_fallthru
          _
      $region52: #{tpu_custom_call.1} parent=5 // pred_fallthru
        _
    $region6: #{tpu_custom_call.1} parent=1 // loop_footer
      %s20 = sadd.s32 1, %s16
    $region7: #{tpu_custom_call.1} parent=1 // loop_footer_branch
      %15 = sbr.rel target = $region3
    $region8: #{tpu_custom_call.1} parent=1 // loop_exit
      _
    %862 = vsyncpa [#allocation3], 1
    %s863 = scalar_lea.sflag [#allocation3], 1
    %864 = vsyncpa %s863, 1

</llo_original>
